<compile_context>
chip_gen: v7x
topology: tpu7x:2x2x1
jax: 0.10.0
libtpu: 0.0.40
codegen_flags: <defaults>
</compile_context>

<pallas_src>
import functools
import math

import jax
import jax.numpy as jnp
from jax.experimental import pallas as pl
from jax.experimental.pallas import tpu as pltpu

_NEG_LARGE = -1e30  # finite "-inf" for padded class columns; exp() -> 0 exactly


def _round_up(a, b):
    return (a + b - 1) // b * b


def _logreg_kernel(x_ref, wt_ref, b_ref, y_ref, cw_ref,
                   logits_ref, partials_ref, *, tile_n, n_valid):
    i = pl.program_id(0)

    # ---- linear layer: cast x -> bf16 in-kernel, MXU bf16xbf16 -> f32 acc ----
    logits = jnp.dot(x_ref[...].astype(jnp.bfloat16), wt_ref[...],
                     preferred_element_type=jnp.float32) + b_ref[...]

    # Lane-dense bf16 writeback (halves the dominant HBM stream).
    logits_ref[...] = logits.astype(jnp.bfloat16)

    # ---- weighted cross-entropy partial sums (all f32) ----
    m = jnp.max(logits, axis=-1, keepdims=True)                  # (tile, 1)
    z = logits - m
    lse = jnp.log(jnp.sum(jnp.exp(z), axis=-1, keepdims=True))   # (tile, 1)

    y = y_ref[...]                                               # (tile, 1) int32
    cls = jax.lax.broadcasted_iota(jnp.int32, logits.shape, 1)   # (tile, C_pad)
    is_y = cls == y

    # Picked logit (z_y) and per-row class weight via masked reductions; avoids
    # materializing full-width logp / onehot float and two full-width multiplies.
    picked = jnp.sum(jnp.where(is_y, z, 0.0), axis=-1, keepdims=True)       # (tile,1)
    w_per = jnp.sum(jnp.where(is_y, cw_ref[...], 0.0), axis=-1, keepdims=True)

    # Mask rows beyond N: boundary blocks read unspecified data, so both nll
    # and w_per must be forced to 0 (never rely on 0 * NaN).
    row = i * tile_n + jax.lax.broadcasted_iota(jnp.int32, (tile_n, 1), 0)
    valid = row < n_valid
    nll = jnp.where(valid, lse - picked, 0.0)                    # (tile, 1)
    w_per = jnp.where(valid, w_per, 0.0)

    num = jnp.sum(w_per * nll, keepdims=True)                    # (1, 1)
    den = jnp.sum(w_per, keepdims=True)                          # (1, 1)

    # Pack [num, den] into a single lane-dense (1, 128) vector: lane0=num, lane1=den.
    lane = jax.lax.broadcasted_iota(jnp.int32, (1, 128), 1)
    partials_ref[...] = jnp.where(
        lane == 0, num, jnp.where(lane == 1, den, 0.0)).reshape(1, 1, 128)


def logistic_regression_forward(x, weight, bias, y, class_weights, *, tile_n=4096):
    """x: (N, D) f32, weight: (C, D) f32, bias: (C,) f32, y: (N,) int,
    class_weights: (C,) f32.  Returns (logits (N, C) f32, loss scalar f32)."""
    N, D = x.shape
    C = weight.shape[0]

    C_PAD = _round_up(max(C, 1), 128)                  # lane-dense class dim

    # Row tile selection:
    #  * large (default 4096, 8192 also fits VMEM on v7x) to amortize the
    #    ~0.35us per-grid-step overhead,
    #  * capped at ceil(N/2) so the "parallel" axis has >= 2 tiles for the
    #    two v7x TensorCores whenever N allows,
    #  * capped so double-buffered f32 x tiles stay ~<= 6 MiB each,
    #  * multiple of 16 (bf16 sublane packing of the logits output).
    vmem_cap = max(16, ((6 * 1024 * 1024) // (D * 4)) // 16 * 16)
    tile = min(_round_up(tile_n, 16), _round_up(pl.cdiv(N, 2), 16), vmem_cap)
    tile = max(tile, 16)
    if tile >= N:
        tile = N               # single full-array block: no boundary reads at all
    num_tiles = pl.cdiv(N, tile)
    n_pad = num_tiles * tile

    # Tiny host-side parameter prep only (no pass over x / y data).
    wt = jnp.zeros((D, C_PAD), jnp.float32).at[:, :C].set(weight.T).astype(jnp.bfloat16)
    b2 = jnp.full((1, C_PAD), _NEG_LARGE, jnp.float32).at[:, :C].set(bias)
    cw2 = jnp.zeros((1, C_PAD), jnp.float32).at[:, :C].set(
        class_weights.astype(jnp.float32))
    y2 = y.astype(jnp.int32).reshape(N, 1)

    kernel = functools.partial(_logreg_kernel, tile_n=tile, n_valid=N)

    cost = pl.CostEstimate(
        flops=2 * n_pad * D * C_PAD + 8 * n_pad * C_PAD,
        transcendentals=n_pad * C_PAD + n_pad,
        bytes_accessed=(N * D * 4                 # x read, native f32, single pass
                        + N * 4                   # labels
                        + n_pad * C_PAD * 2       # bf16 logits writeback
                        + num_tiles * 128 * 4     # per-tile partials
                        + D * C_PAD * 2 + 2 * C_PAD * 4),
    )

    logits_pad, partials = pl.pallas_call(
        kernel,
        grid_spec=pltpu.PrefetchScalarGridSpec(
            num_scalar_prefetch=0,
            grid=(num_tiles,),
            in_specs=[
                pl.BlockSpec((tile, D), lambda i: (i, 0)),       # x row tile (f32)
                pl.BlockSpec((D, C_PAD), lambda i: (0, 0)),      # W^T (bf16), resident
                pl.BlockSpec((1, C_PAD), lambda i: (0, 0)),      # bias, resident
                pl.BlockSpec((tile, 1), lambda i: (i, 0)),       # labels row tile
                pl.BlockSpec((1, C_PAD), lambda i: (0, 0)),      # class weights
            ],
            out_specs=[
                pl.BlockSpec((tile, C_PAD), lambda i: (i, 0)),   # bf16 logits
                pl.BlockSpec((1, 1, 128), lambda i: (i, 0, 0)),  # per-tile partials
            ],
        ),
        out_shape=[
            jax.ShapeDtypeStruct((n_pad, C_PAD), jnp.bfloat16),
            jax.ShapeDtypeStruct((num_tiles, 1, 128), jnp.float32),
        ],
        compiler_params=pltpu.CompilerParams(
            dimension_semantics=("parallel",),
            vmem_limit_bytes=32 * 1024 * 1024,
        ),
        cost_estimate=cost,
    )(x.astype(jnp.float32), wt, b2, y2, cw2)

    logits = logits_pad[:N, :C].astype(jnp.float32)   # bf16-rounded values, f32 dtype
    loss = jnp.sum(partials[:, 0, 0]) / jnp.sum(partials[:, 0, 1])
    return logits, loss


if __name__ == "__main__":
    # Small shapes consistent with the module: num_dim=32, num_class=2, batch=8.
    N, D, C = 8, 32, 2
    anomaly_ratio = 0.1

    key = jax.random.PRNGKey(0)
    kx, kw, ky = jax.random.split(key, 3)

    # Deterministic parameter init (xavier_uniform for weight, zeros for bias).
    bound = math.sqrt(6.0 / (D + C))
    weight = jax.random.uniform(kw, (C, D), jnp.float32, -bound, bound)
    bias = jnp.zeros((C,), jnp.float32)
    class_weights = jnp.array([1.0, 1.0 / anomaly_ratio], jnp.float32)

    x = jax.random.normal(kx, (N, D), jnp.float32)
    y = jax.random.randint(ky, (N,), 0, C, jnp.int32)

    logits, loss = logistic_regression_forward(x, weight, bias, y, class_weights)
    jax.block_until_ready((logits, loss))

    # Pure-JAX reference (same bf16-input / f32-accumulate precision choice).
    x_bf = x.astype(jnp.bfloat16).astype(jnp.float32)
    w_bf = weight.astype(jnp.bfloat16).astype(jnp.float32)
    ref_logits = x_bf @ w_bf.T + bias
    lp = jax.nn.log_softmax(ref_logits, axis=-1)
    nll = -jnp.take_along_axis(lp, y[:, None], axis=-1)[:, 0]
    w_per = class_weights[y]
    ref_loss = jnp.sum(w_per * nll) / jnp.sum(w_per)

    assert logits.shape == (N, C)
    # Returned logits are bf16-rounded (documented precision choice) -> loose tol.
    assert jnp.allclose(logits, ref_logits, atol=3e-2, rtol=3e-2), "logits mismatch"
    # Loss is computed from the full-precision f32 logits inside the kernel.
    assert jnp.allclose(loss, ref_loss, atol=2e-3, rtol=2e-3), "loss mismatch"

    print("KERNEL_OK")
</pallas_src>

<mosaic_0001>
module attributes {stable_mosaic.version = 11 : i64} {
  func.func @_logreg_kernel(%arg0: i32, %arg1: memref<8x32xf32, #tpu.memory_space<vmem>>, %arg2: memref<32x128xbf16, #tpu.memory_space<vmem>>, %arg3: memref<1x128xf32, #tpu.memory_space<vmem>>, %arg4: memref<8x1xi32, #tpu.memory_space<vmem>>, %arg5: memref<1x128xf32, #tpu.memory_space<vmem>>, %arg6: memref<8x128xbf16, #tpu.memory_space<vmem>>, %arg7: memref<1x1x128xf32, #tpu.memory_space<vmem>>) attributes {dimension_semantics = [#tpu.dimension_semantics<parallel>], iteration_bounds = array<i64: 1>, scalar_prefetch = 0 : i64, scratch_operands = 0 : i64, tpu.core_type = #tpu.core_type<tc>, window_params = [{transform_indices = @transform_0, window_bounds = array<i64: 8, 32>}, {pipeline_mode = #tpu.pipeline_mode<synchronous>, transform_indices = @transform_1, window_bounds = array<i64: 32, 128>}, {pipeline_mode = #tpu.pipeline_mode<synchronous>, transform_indices = @transform_2, window_bounds = array<i64: 1, 128>}, {transform_indices = @transform_3, window_bounds = array<i64: 8, 1>}, {pipeline_mode = #tpu.pipeline_mode<synchronous>, transform_indices = @transform_4, window_bounds = array<i64: 1, 128>}, {transform_indices = @transform_5, window_bounds = array<i64: 8, 128>}, {transform_indices = @transform_6, window_bounds = array<i64: 1, 1, 128>}]} {
    %c0 = arith.constant 0 : index
    %c0_0 = arith.constant 0 : index
    %0 = vector.load %arg1[%c0, %c0_0] : memref<8x32xf32, #tpu.memory_space<vmem>>, vector<8x32xf32>
    %1 = arith.truncf %0 : vector<8x32xf32> to vector<8x32xbf16>
    %c0_1 = arith.constant 0 : index
    %c0_2 = arith.constant 0 : index
    %2 = vector.load %arg2[%c0_1, %c0_2] : memref<32x128xbf16, #tpu.memory_space<vmem>>, vector<32x128xbf16>
    %cst = arith.constant dense<0.000000e+00> : vector<8x128xf32>
    %3 = tpu.matmul %1, %2, %cst {dimension_numbers = #tpu.dot_dimension_numbers<[1], [0], [0], [1], [0, 0, 1, 1], [], []>} : vector<8x32xbf16>, vector<32x128xbf16>, vector<8x128xf32> -> vector<8x128xf32>
    %c0_3 = arith.constant 0 : index
    %c0_4 = arith.constant 0 : index
    %4 = vector.load %arg3[%c0_3, %c0_4] : memref<1x128xf32, #tpu.memory_space<vmem>>, vector<1x128xf32>
    %5 = vector.broadcast %4 : vector<1x128xf32> to vector<8x128xf32>
    %6 = arith.addf %3, %5 : vector<8x128xf32>
    %7 = arith.truncf %6 : vector<8x128xf32> to vector<8x128xbf16>
    %c0_5 = arith.constant 0 : index
    %c0_6 = arith.constant 0 : index
    %8 = vector.load %arg6[%c0_5, %c0_6] : memref<8x128xbf16, #tpu.memory_space<vmem>>, vector<8x128xbf16>
    tpu.vector_store %arg6[%c0_5, %c0_6], %7 {strides = array<i32>} : memref<8x128xbf16, #tpu.memory_space<vmem>>, vector<8x128xbf16>,
    %cst_7 = arith.constant dense<0xFF800000> : vector<8xf32>
    %9 = vector.multi_reduction <maximumf>, %6, %cst_7 [1] : vector<8x128xf32> to vector<8xf32>
    %10 = vector.shape_cast %9 : vector<8xf32> to vector<8x1xf32>
    %11 = vector.broadcast %10 : vector<8x1xf32> to vector<8x128xf32>
    %12 = arith.subf %6, %11 : vector<8x128xf32>
    %13 = math.exp %12 : vector<8x128xf32>
    %cst_8 = arith.constant dense<0.000000e+00> : vector<8xf32>
    %14 = vector.multi_reduction <add>, %13, %cst_8 [1] : vector<8x128xf32> to vector<8xf32>
    %15 = vector.shape_cast %14 : vector<8xf32> to vector<8x1xf32>
    %16 = math.log %15 : vector<8x1xf32>
    %c0_9 = arith.constant 0 : index
    %c0_10 = arith.constant 0 : index
    %17 = vector.load %arg4[%c0_9, %c0_10] : memref<8x1xi32, #tpu.memory_space<vmem>>, vector<8x1xi32>
    %18 = tpu.iota {dimensions = array<i32: 1>} : vector<8x128xi32>
    %19 = vector.broadcast %17 : vector<8x1xi32> to vector<8x128xi32>
    %20 = arith.cmpi eq, %18, %19 : vector<8x128xi32>
    %cst_11 = arith.constant 0.000000e+00 : f32
    %21 = vector.broadcast %cst_11 : f32 to vector<8x128xf32>
    %22 = arith.select %20, %12, %21 : vector<8x128xi1>, vector<8x128xf32>
    %cst_12 = arith.constant dense<0.000000e+00> : vector<8xf32>
    %23 = vector.multi_reduction <add>, %22, %cst_12 [1] : vector<8x128xf32> to vector<8xf32>
    %24 = vector.shape_cast %23 : vector<8xf32> to vector<8x1xf32>
    %c0_13 = arith.constant 0 : index
    %c0_14 = arith.constant 0 : index
    %25 = vector.load %arg5[%c0_13, %c0_14] : memref<1x128xf32, #tpu.memory_space<vmem>>, vector<1x128xf32>
    %cst_15 = arith.constant 0.000000e+00 : f32
    %26 = vector.shape_cast %25 : vector<1x128xf32> to vector<1x128xf32>
    %27 = vector.broadcast %26 : vector<1x128xf32> to vector<8x128xf32>
    %28 = vector.broadcast %cst_15 : f32 to vector<8x128xf32>
    %29 = arith.select %20, %27, %28 : vector<8x128xi1>, vector<8x128xf32>
    %cst_16 = arith.constant dense<0.000000e+00> : vector<8xf32>
    %30 = vector.multi_reduction <add>, %29, %cst_16 [1] : vector<8x128xf32> to vector<8xf32>
    %31 = vector.shape_cast %30 : vector<8xf32> to vector<8x1xf32>
    %c8_i32 = arith.constant 8 : i32
    %32 = arith.muli %arg0, %c8_i32 : i32
    %33 = tpu.iota {dimensions = array<i32: 0>} : vector<8x1xi32>
    %34 = vector.broadcast %32 : i32 to vector<8x1xi32>
    %35 = arith.addi %34, %33 : vector<8x1xi32>
    %c8_i32_17 = arith.constant 8 : i32
    %36 = vector.broadcast %c8_i32_17 : i32 to vector<8x1xi32>
    %37 = arith.cmpi slt, %35, %36 : vector<8x1xi32>
    %38 = arith.subf %16, %24 : vector<8x1xf32>
    %cst_18 = arith.constant 0.000000e+00 : f32
    %39 = vector.broadcast %cst_18 : f32 to vector<8x1xf32>
    %40 = arith.select %37, %38, %39 : vector<8x1xi1>, vector<8x1xf32>
    %cst_19 = arith.constant 0.000000e+00 : f32
    %41 = vector.broadcast %cst_19 : f32 to vector<8x1xf32>
    %42 = arith.select %37, %31, %41 : vector<8x1xi1>, vector<8x1xf32>
    %43 = arith.mulf %42, %40 : vector<8x1xf32>
    %44 = vector.shape_cast %43 : vector<8x1xf32> to vector<1x8x1xf32>
    %cst_20 = arith.constant dense<0.000000e+00> : vector<1xf32>
    %45 = vector.multi_reduction <add>, %44, %cst_20 [1, 2] : vector<1x8x1xf32> to vector<1xf32>
    %46 = vector.shape_cast %45 : vector<1xf32> to vector<1x1x1xf32>
    %47 = vector.extract %46[0, 0, 0] : f32 from vector<1x1x1xf32>
    %48 = vector.broadcast %47 : f32 to vector<1x1xf32>
    %49 = vector.shape_cast %42 : vector<8x1xf32> to vector<1x8x1xf32>
    %cst_21 = arith.constant dense<0.000000e+00> : vector<1xf32>
    %50 = vector.multi_reduction <add>, %49, %cst_21 [1, 2] : vector<1x8x1xf32> to vector<1xf32>
    %51 = vector.shape_cast %50 : vector<1xf32> to vector<1x1x1xf32>
    %52 = vector.extract %51[0, 0, 0] : f32 from vector<1x1x1xf32>
    %53 = vector.broadcast %52 : f32 to vector<1x1xf32>
    %54 = tpu.iota {dimensions = array<i32: 1>} : vector<1x128xi32>
    %c0_i32 = arith.constant 0 : i32
    %55 = vector.broadcast %c0_i32 : i32 to vector<1x128xi32>
    %56 = arith.cmpi eq, %54, %55 : vector<1x128xi32>
    %c1_i32 = arith.constant 1 : i32
    %57 = vector.broadcast %c1_i32 : i32 to vector<1x128xi32>
    %58 = arith.cmpi eq, %54, %57 : vector<1x128xi32>
    %cst_22 = arith.constant 0.000000e+00 : f32
    %59 = vector.shape_cast %53 : vector<1x1xf32> to vector<1x1xf32>
    %60 = vector.broadcast %59 : vector<1x1xf32> to vector<1x128xf32>
    %61 = vector.broadcast %cst_22 : f32 to vector<1x128xf32>
    %62 = arith.select %58, %60, %61 : vector<1x128xi1>, vector<1x128xf32>
    %63 = vector.shape_cast %48 : vector<1x1xf32> to vector<1x1xf32>
    %64 = vector.broadcast %63 : vector<1x1xf32> to vector<1x128xf32>
    %65 = arith.select %56, %64, %62 : vector<1x128xi1>, vector<1x128xf32>
    %66 = vector.shape_cast %65 : vector<1x128xf32> to vector<1x1x128xf32>
    %c0_23 = arith.constant 0 : index
    %c0_24 = arith.constant 0 : index
    %c0_25 = arith.constant 0 : index
    %67 = vector.load %arg7[%c0_23, %c0_24, %c0_25] : memref<1x1x128xf32, #tpu.memory_space<vmem>>, vector<1x1x128xf32>
    tpu.vector_store %arg7[%c0_23, %c0_24, %c0_25], %66 {strides = array<i32>} : memref<1x1x128xf32, #tpu.memory_space<vmem>>, vector<1x1x128xf32>,
    return
  }
  func.func @transform_0(%arg0: i32) -> (i32, i32) {
    %c0_i32 = arith.constant 0 : i32
    %c0_i32_0 = arith.constant 0 : i32
    return %arg0, %c0_i32 : i32, i32
  }
  func.func @transform_1(%arg0: i32) -> (i32, i32) {
    %c0_i32 = arith.constant 0 : i32
    %c0_i32_0 = arith.constant 0 : i32
    %c0_i32_1 = arith.constant 0 : i32
    return %c0_i32, %c0_i32_0 : i32, i32
  }
  func.func @transform_2(%arg0: i32) -> (i32, i32) {
    %c0_i32 = arith.constant 0 : i32
    %c0_i32_0 = arith.constant 0 : i32
    %c0_i32_1 = arith.constant 0 : i32
    return %c0_i32, %c0_i32_0 : i32, i32
  }
  func.func @transform_3(%arg0: i32) -> (i32, i32) {
    %c0_i32 = arith.constant 0 : i32
    %c0_i32_0 = arith.constant 0 : i32
    return %arg0, %c0_i32 : i32, i32
  }
  func.func @transform_4(%arg0: i32) -> (i32, i32) {
    %c0_i32 = arith.constant 0 : i32
    %c0_i32_0 = arith.constant 0 : i32
    %c0_i32_1 = arith.constant 0 : i32
    return %c0_i32, %c0_i32_0 : i32, i32
  }
  func.func @transform_5(%arg0: i32) -> (i32, i32) {
    %c0_i32 = arith.constant 0 : i32
    %c0_i32_0 = arith.constant 0 : i32
    return %arg0, %c0_i32 : i32, i32
  }
  func.func @transform_6(%arg0: i32) -> (i32, i32, i32) {
    %c0_i32 = arith.constant 0 : i32
    %c0_i32_0 = arith.constant 0 : i32
    %c0_i32_1 = arith.constant 0 : i32
    return %arg0, %c0_i32, %c0_i32_0 : i32, i32, i32
  }
}

</mosaic_0001>

<llo_original>
// kernel: tpu_custom_call.1
$region0: #{tpu_custom_call.1}
  #allocation0 [shape = 'u32[]', space=smem, size = 0x4, offset = 0x4, fixed_abs, tag = 'smem constant byte address 0x4 - core index']
  #allocation1 [shape = 'u32[144,128]{1,0:T(1,128)}', space=vmem, size = 0x12000, scoped, tag = 'internal scratch']
  %s0 = inlined_call_operand.vmem [shape: f32[8,32], index: 0, kind: input, shape index: {}]
  %s1 = inlined_call_operand.hbm [shape: bf16[32,128], index: 1, kind: input, shape index: {}]
  %s2 = inlined_call_operand.vmem [shape: f32[1,128], index: 2, kind: input, shape index: {}]
  %s3 = inlined_call_operand.vmem [shape: s32[8,1], index: 3, kind: input, shape index: {}]
  %s4 = inlined_call_operand.vmem [shape: f32[1,128], index: 4, kind: input, shape index: {}]
  %s5 = inlined_call_operand.hbm [shape: bf16[8,128], index: 5, kind: output, shape index: {0}]
  %s6 = inlined_call_operand.hbm [shape: f32[1,1,128], index: 6, kind: output, shape index: {1}]
  %7 = xla_tuple %s5, %s6
  %s8 = sld [smem:[#allocation0]]
  $region42: #{tpu_custom_call.1} parent=0
    _
  %s10 = ssub.s32 1, %s8
  %s11 = scalar_select 0, %s10, %s8
  $region1: #{tpu_custom_call.1} parent=0
    #allocation2 [shape = 'u8[8192]{0}', space=vmem, size = 0x2000, scoped, tag = 'input window, operand 1, single buffered']
    #allocation3 [shape = 's32[1]{0}', space=sflag, size = 0x4, scoped, tag = 'scoped memory for tpu_custom_call.1']
    #allocation4 [shape = 's32[1]{0}', space=sflag, size = 0x4, scoped, tag = 'scoped memory for tpu_custom_call.1']
    #allocation5 [shape = 'u8[2048]{0}', space=vmem, size = 0x800, scoped, tag = 'output window, operand 0, single buffered']
    #allocation6 [shape = 'u8[512]{0}', space=vmem, size = 0x400, scoped, tag = 'output window, operand 1, single buffered']
    #allocation7 [shape = 's32[1]{0}', space=sflag, size = 0x4, scoped, tag = 'scoped memory for tpu_custom_call.1']
    %12 = vsyncpa [#allocation3], 0
    %13 = vsyncpa [#allocation4], 0
    %14 = vsyncpa [#allocation7], 0
    // Predicated region
    $region2: #{tpu_custom_call.1} parent=1 // pred_check
      _
    $region3: #{tpu_custom_call.1} parent=1 // pred_check_branch
      %16 = sbr.rel (0) target = $region5
    $region4: #{tpu_custom_call.1} parent=1 // pred_region
      _
    $region5: #{tpu_custom_call.1} parent=1 // pred_fallthru
      _
    // Predicated region
    $region6: #{tpu_custom_call.1} parent=1 // pred_check
      _
    $region7: #{tpu_custom_call.1} parent=1 // pred_check_branch
      %18 = sbr.rel (0) target = $region9
    $region8: #{tpu_custom_call.1} parent=1 // pred_region
      %s20 = ssub.s32 256, 256
      %21 = vsyncadd [#allocation3], %s20
      %s22 = sshll.u32 [#allocation2], 4
      %s23 = int_to_ptr.vmem [resolvable:$true] %s22
      %28 = dma.hbm_to_vmem [thread:$0]  %s1, 256, %s23, [#allocation3], 64, 64, 4
    $region9: #{tpu_custom_call.1} parent=1 // pred_fallthru
      _
    // Predicated region
    $region10: #{tpu_custom_call.1} parent=1 // pred_check
      _
    $region11: #{tpu_custom_call.1} parent=1 // pred_check_branch
      %30 = sbr.rel (0) target = $region13
    $region12: #{tpu_custom_call.1} parent=1 // pred_region
      _
    $region13: #{tpu_custom_call.1} parent=1 // pred_fallthru
      _
    // Predicated region
    $region14: #{tpu_custom_call.1} parent=1 // pred_check
      _
    $region15: #{tpu_custom_call.1} parent=1 // pred_check_branch
      %32 = sbr.rel (0) target = $region17
    $region16: #{tpu_custom_call.1} parent=1 // pred_region
      _
    $region17: #{tpu_custom_call.1} parent=1 // pred_fallthru
      _
    // Predicated region
    $region18: #{tpu_custom_call.1} parent=1 // pred_check
      _
    $region19: #{tpu_custom_call.1} parent=1 // pred_check_branch
      %34 = sbr.rel (0) target = $region21
    $region20: #{tpu_custom_call.1} parent=1 // pred_region
      _
    $region21: #{tpu_custom_call.1} parent=1 // pred_fallthru
      _
    // Predicated region
    $region22: #{tpu_custom_call.1} parent=1 // pred_check
      _
    $region23: #{tpu_custom_call.1} parent=1 // pred_check_branch
      %36 = sbr.rel (0) target = $region25
    $region24: #{tpu_custom_call.1} parent=1 // pred_region
      %37 = dma.done [#allocation3], 256
    $region25: #{tpu_custom_call.1} parent=1 // pred_fallthru
      _
    %v39 = vld [vmem:[%s0] sm:$0xff]
    %v40 = vpack.c.bf16 %v39, %v39
    %v41 = vld [vmem:[#allocation2] sm:$0xf]
    %v42 = vld [vmem:[#allocation2 + $0x4] sm:$0xf]
    %v43 = vld [vmem:[#allocation2 + $0x8] sm:$0xf]
    %v44 = vld [vmem:[#allocation2 + $0xc] sm:$0xf]
    %v45 = vld [vmem:[%s2] sm:$0x1]
    %v47 = vlaneseq
    %v48 = vshrl.u32 %v47, 7
    %v49 = vsub.s32 0, %v48
    %v50 = vrot.slane %v45, %v49
    %v56 = vunpack.c.l.b16 %v41
    %v57 = vunpack.c.l.b16 %v42
    %v58 = vunpack.c.l.b16 %v43
    %v59 = vunpack.c.l.b16 %v44
    %v60 = vpack.c.b16 %v57, %v56
    %v61 = vpack.c.b16 %v59, %v58
    %vm64 = vcmask 261120
    %v66 = vsel %vm64, %v40, 0
    %68 = vmatprep.subr.bf16.mxu0 0
    %69 = vmatpush1.bf16.msra.mxu0 %v60
    %70 = vmatprep.subr.bf16.mxu0 0
    %71 = vmatpush1.bf16.msra.mxu0 %v61
    %72 = vmatprep.subr.bf16.mxu0 0
    %73 = vmatpush1.bf16.msra.mxu0 0
    %74 = vmatprep.subr.bf16.mxu0 0
    %75 = vmatpush1.bf16.msra.mxu0 0
    %76 = vmatprep.subr.bf16.mxu0 0
    %77 = vmatpush1.bf16.msra.mxu0 0
    %78 = vmatprep.subr.bf16.mxu0 0
    %79 = vmatpush1.bf16.msra.mxu0 0
    %80 = vmatprep.subr.bf16.mxu0 0
    %81 = vmatpush1.bf16.msra.mxu0 0
    %82 = vmatprep.subr.bf16.mxu0 0
    %83 = vmatpush1.bf16.msra.mxu0 0
    %84 = vmatprep.subr.bf16.mxu0 0
    %85 = vmatpush1.bf16.msra.mxu0 0
    %86 = vmatprep.subr.bf16.mxu0 0
    %87 = vmatpush1.bf16.msra.mxu0 0
    %88 = vmatprep.subr.bf16.mxu0 0
    %89 = vmatpush1.bf16.msra.mxu0 0
    %90 = vmatprep.subr.bf16.mxu0 0
    %91 = vmatpush1.bf16.msra.mxu0 0
    %92 = vmatprep.subr.bf16.mxu0 0
    %93 = vmatpush1.bf16.msra.mxu0 0
    %94 = vmatprep.subr.bf16.mxu0 0
    %95 = vmatpush1.bf16.msra.mxu0 0
    %96 = vmatprep.subr.bf16.mxu0 0
    %97 = vmatpush1.bf16.msra.mxu0 0
    %98 = vmatprep.subr.bf16.mxu0 0
    %99 = vmatpush1.bf16.msra.mxu0 0
    %100 = vmatprep.mubr.bf16.mxu0 0
    %101 = vmatmul.mubr.bf16.gmra.mrb[0].mxu0 %v66
    %v102 = vpop.f32.mrb[0].mxu0
    %v103 = vadd.f32 %v50, %v102
    %v104 = vpop.f32.mrb[0].mxu0
    %v105 = vpop.f32.mrb[0].mxu0
    %v106 = vpop.f32.mrb[0].mxu0
    %107 = vdwg.mxu0
    %v108 = vpack.c.bf16 %v103, %v103
    %109 = vst [vmem:[#allocation5] sm:$0xf] %v108
    %110 = vmax.xlane.f32.xlu0 %v103
    %v111 = vpop.xlane.xlu0 %110
    %v112 = vsub.f32 %v103, %v111
    %v113 = vmul.f32 %v112, 1.442695
    %v114 = vpow.pop %v113
    %115 = vadd.xlane.f32.xlu0 %v114
    %v116 = vpop.xlane.xlu0 %115
    %v117 = vlog2.pop %v116
    %v118 = vmul.f32 %v117, 0.6931472
    %v119 = vld [vmem:[%s3] sm:$0xff]
    %v120 = vlaneseq
    %v121 = vand.u32 %v120, 127
    %122 = vset.pattern.permute.xlu0 0
    %123 = vperm.xlu0 %122, %v119
    %v124 = vpop.permute.xlu0 %123
    %vm125 = vcmp.eq.s32.totalorder %v121, %v124
    %v126 = vsel %vm125, %v112, 0.0
    %127 = vadd.xlane.f32.xlu0 %v126
    %v128 = vpop.xlane.xlu0 %127
    %v129 = vld [vmem:[%s4] sm:$0x1]
    %v131 = vlaneseq
    %v132 = vshrl.u32 %v131, 7
    %v133 = vsub.s32 0, %v132
    %v134 = vrot.slane %v129, %v133
    %v136 = vsel %vm125, %v134, 0.0
    %137 = vadd.xlane.f32.xlu0 %v136
    %v138 = vpop.xlane.xlu0 %137
    %s139 = smul.u32 0, 8
    %v140 = vlaneseq
    %v141 = vshrl.u32 %v140, 7
    %v142 = vstv %s139
    %v143 = vadd.s32 %v142, %v141
    %vm144 = vcmp.lt.s32.totalorder %v143, 8
    %v145 = vsub.f32 %v118, %v128
    %v146 = vsel %vm144, %v145, 0.0
    %v147 = vsel %vm144, %v138, 0.0
    %v148 = vmul.f32 %v147, %v146
    %vm149 = vcmask 7168
    %v150 = vsel %vm149, %v148, 0.0
    %151 = vadd.xlane.f32.xlu0 %v150
    %v152 = vpop.xlane.xlu0 %151
    %v153 = vrot.slane %v152, 4
    %v154 = vadd.f32 %v152, %v153
    %v155 = vrot.slane %v154, 2
    %v156 = vadd.f32 %v154, %v155
    %v157 = vrot.slane %v156, 1
    %v158 = vadd.f32 %v156, %v157
    %s159 = vtos %v158
    %v160 = vsel %vm149, %v147, 0.0
    %161 = vadd.xlane.f32.xlu0 %v160
    %v162 = vpop.xlane.xlu0 %161
    %v163 = vrot.slane %v162, 4
    %v164 = vadd.f32 %v162, %v163
    %v165 = vrot.slane %v164, 2
    %v166 = vadd.f32 %v164, %v165
    %v167 = vrot.slane %v166, 1
    %v168 = vadd.f32 %v166, %v167
    %s169 = vtos %v168
    %vm170 = vcmp.eq.s32.totalorder %v121, 0
    %vm171 = vcmp.eq.s32.totalorder %v121, 1
    %v172 = vstv %s169
    %v173 = vsel %vm171, %v172, 0.0
    %v174 = vstv %s159
    %v175 = vsel %vm170, %v174, %v173
    %176 = vst [vmem:[#allocation6] sm:$0x1] %v175
    // Predicated region
    $region26: #{tpu_custom_call.1} parent=1 // pred_check
      _
    $region27: #{tpu_custom_call.1} parent=1 // pred_check_branch
      %178 = sbr.rel (0) target = $region29
    $region28: #{tpu_custom_call.1} parent=1 // pred_region
      %s180 = ssub.s32 64, 64
      %181 = vsyncadd [#allocation4], %s180
      %s183 = sshll.u32 [#allocation5], 4
      %s184 = int_to_ptr.vmem [resolvable:$true] %s183
      %186 = dma.vmem_to_hbm [thread:$0]  %s184, 64, %s5, [#allocation4]
    $region29: #{tpu_custom_call.1} parent=1 // pred_fallthru
      _
    // Predicated region
    $region30: #{tpu_custom_call.1} parent=1 // pred_check
      _
    $region31: #{tpu_custom_call.1} parent=1 // pred_check_branch
      %188 = sbr.rel (0) target = $region33
    $region32: #{tpu_custom_call.1} parent=1 // pred_region
      %s190 = ssub.s32 16, 16
      %191 = vsyncadd [#allocation7], %s190
      %s193 = sshll.u32 [#allocation6], 4
      %s194 = int_to_ptr.vmem [resolvable:$true] %s193
      %196 = dma.vmem_to_hbm [thread:$0]  %s194, 16, %s6, [#allocation7]
    $region33: #{tpu_custom_call.1} parent=1 // pred_fallthru
      _
    // Predicated region
    $region34: #{tpu_custom_call.1} parent=1 // pred_check
      _
    $region35: #{tpu_custom_call.1} parent=1 // pred_check_branch
      %198 = sbr.rel (0) target = $region37
    $region36: #{tpu_custom_call.1} parent=1 // pred_region
      %199 = dma.done [#allocation4], 64
    $region37: #{tpu_custom_call.1} parent=1 // pred_fallthru
      _
    // Predicated region
    $region38: #{tpu_custom_call.1} parent=1 // pred_check
      _
    $region39: #{tpu_custom_call.1} parent=1 // pred_check_branch
      %201 = sbr.rel (0) target = $region41
    $region40: #{tpu_custom_call.1} parent=1 // pred_region
      %202 = dma.done [#allocation7], 16
    $region41: #{tpu_custom_call.1} parent=1 // pred_fallthru
      _
    %203 = vsyncpa [#allocation3], 1
    %204 = vsyncpa [#allocation4], 1
    %205 = vsyncpa [#allocation7], 1

</llo_original>
